<compile_context>
chip_gen: v7x
topology: tpu7x:2x2x1
jax: 0.10.0
libtpu: 0.0.40
codegen_flags: <defaults>
</compile_context>

<pallas_src>
import jax
import jax.numpy as jnp
from jax.experimental import pallas as pl
from jax.experimental.pallas import tpu as pltpu


def _round_up(x, m):
    return (x + m - 1) // m * m


def _adversary_kernel(x_ref, lf_ref,
                      wt_ref, bt_ref,
                      w1a_ref, w1b_ref, b1_ref,
                      w2_ref, b2_ref,
                      o_ref):
    # feature_transform: Linear(input_dim -> hidden); bf16 operands, f32 accum.
    t = jnp.dot(x_ref[...], wt_ref[...], preferred_element_type=jnp.float32)
    t = t + bt_ref[...]                                    # (tm, Hp) f32
    # (padded hidden columns of t are exactly 0 because Wt/bt pads are 0)

    # discriminator layer 1: Linear(2*hidden -> hidden) on [t ; lf] + ReLU,
    # without materializing the concat.
    h = jnp.dot(t.astype(jnp.bfloat16), w1a_ref[...],
                preferred_element_type=jnp.float32)
    h = h + jnp.dot(lf_ref[...], w1b_ref[...],
                    preferred_element_type=jnp.float32)
    h = jnp.maximum(h + b1_ref[...], 0.0)                  # (tm, Hp) f32

    # discriminator layer 2: Linear(hidden -> 1) + Sigmoid, produced lane-dense
    # as a (1, tm) row so the store is an unmasked full-lane vst.
    logits = jnp.dot(w2_ref[...], h.T, preferred_element_type=jnp.float32)
    o_ref[...] = jax.nn.sigmoid(logits + b2_ref[...])      # (1, tm) f32


def bimatter_adversary(original_features, learned_features, params, *, tm=256):
    """original_features: (B, N, input_dim), learned_features: (B, N, hidden_dim).
    Returns (B, N, 1) float32, matching the PyTorch forward."""
    B, N, input_dim = original_features.shape
    hidden_dim = learned_features.shape[-1]
    M = B * N

    wt, bt, w1, b1, w2, b2 = params

    # ---- pad the hidden (matmul output / second-layer K) dim to lane width --
    Hp = _round_up(hidden_dim, 128)
    wt_t = jnp.zeros((input_dim, Hp), jnp.float32).at[:, :hidden_dim].set(wt.T)
    w1a = jnp.zeros((Hp, Hp), jnp.float32).at[
        :hidden_dim, :hidden_dim].set(w1[:, :hidden_dim].T)
    w1b = jnp.zeros((hidden_dim, Hp), jnp.float32).at[
        :, :hidden_dim].set(w1[:, hidden_dim:].T)
    w2_row = jnp.zeros((1, Hp), jnp.float32).at[0, :hidden_dim].set(w2[0])
    bt_p = jnp.zeros((1, Hp), jnp.float32).at[0, :hidden_dim].set(bt)
    b1_p = jnp.zeros((1, Hp), jnp.float32).at[0, :hidden_dim].set(b1)
    b2_2d = b2.reshape(1, 1).astype(jnp.float32)
    # matmul weight operands in bf16 (accumulation stays f32 in-kernel)
    wt_t = wt_t.astype(jnp.bfloat16)
    w1a = w1a.astype(jnp.bfloat16)
    w1b = w1b.astype(jnp.bfloat16)

    # ---- row tiling (tail-safe, lane-width multiples) ------------------------
    tm = max(128, _round_up(tm, 128))
    tm = min(tm, _round_up(M, 128))
    while tm > 128 and _round_up(M, tm) // tm < 2:
        tm -= 128   # keep >=2 grid steps when possible so both v7x TCs get work
    Mp = _round_up(M, tm)
    G = Mp // tm

    x = original_features.reshape(M, input_dim).astype(jnp.bfloat16)
    lf = learned_features.reshape(M, hidden_dim).astype(jnp.bfloat16)
    if Mp > M:
        x = jnp.pad(x, ((0, Mp - M), (0, 0)))
        lf = jnp.pad(lf, ((0, Mp - M), (0, 0)))

    rows = lambda i: (i, 0)
    full = lambda i: (0, 0)

    out = pl.pallas_call(
        _adversary_kernel,
        out_shape=jax.ShapeDtypeStruct((G, tm), jnp.float32),
        grid_spec=pltpu.PrefetchScalarGridSpec(
            num_scalar_prefetch=0,
            grid=(G,),
            in_specs=[
                pl.BlockSpec((tm, input_dim), rows),        # x rows (bf16)
                pl.BlockSpec((tm, hidden_dim), rows),       # learned rows (bf16)
                pl.BlockSpec((input_dim, Hp), full),        # Wt^T (bf16, padded)
                pl.BlockSpec((1, Hp), full),                # bt   (f32, padded)
                pl.BlockSpec((Hp, Hp), full),               # W1a^T (bf16, padded)
                pl.BlockSpec((hidden_dim, Hp), full),       # W1b^T (bf16, padded)
                pl.BlockSpec((1, Hp), full),                # b1   (f32, padded)
                pl.BlockSpec((1, Hp), full),                # w2 row (f32, padded)
                pl.BlockSpec((1, 1), full),                 # b2 scalar
            ],
            out_specs=pl.BlockSpec((1, tm), rows),          # lane-dense output
        ),
        compiler_params=pltpu.CompilerParams(
            dimension_semantics=("parallel",),
            vmem_limit_bytes=32 * 1024 * 1024,
        ),
    )(x, lf, wt_t, bt_p, w1a, w1b, b1_p, w2_row, b2_2d)

    # drop row padding, restore (B, N, 1)
    return out.reshape(-1)[:M].reshape(B, N, 1)


def init_params(key, input_dim, hidden_dim):
    """Deterministic synthetic parameters matching nn.Linear shapes."""
    ks = jax.random.split(key, 6)
    wt = jax.random.normal(ks[0], (hidden_dim, input_dim), jnp.float32) * 0.1
    bt = jax.random.normal(ks[1], (hidden_dim,), jnp.float32) * 0.1
    w1 = jax.random.normal(ks[2], (hidden_dim, hidden_dim * 2), jnp.float32) * 0.1
    b1 = jax.random.normal(ks[3], (hidden_dim,), jnp.float32) * 0.1
    w2 = jax.random.normal(ks[4], (1, hidden_dim), jnp.float32) * 0.1
    b2 = jax.random.normal(ks[5], (1,), jnp.float32) * 0.1
    return (wt, bt, w1, b1, w2, b2)


def _reference(original_features, learned_features, params):
    """Pure-JAX f32 reference replicating the PyTorch forward exactly."""
    wt, bt, w1, b1, w2, b2 = params
    t = original_features @ wt.T + bt
    combined = jnp.concatenate([t, learned_features], axis=-1)
    flat = combined.reshape(-1, combined.shape[-1])
    h = jax.nn.relu(flat @ w1.T + b1)
    out = jax.nn.sigmoid(h @ w2.T + b2)
    return out.reshape(original_features.shape[0], original_features.shape[1], 1)


if __name__ == "__main__":
    B, N = 2, 8
    input_dim, hidden_dim = 32, 32

    key = jax.random.PRNGKey(0)
    k_x, k_lf, k_p = jax.random.split(key, 3)
    original = jax.random.normal(k_x, (B, N, input_dim), jnp.float32)
    learned = jax.random.normal(k_lf, (B, N, hidden_dim), jnp.float32)
    params = init_params(k_p, input_dim, hidden_dim)

    out = bimatter_adversary(original, learned, params)
    out = jax.block_until_ready(out)

    ref = _reference(original, learned, params)
    assert out.shape == (B, N, 1)
    # bf16 matmul operands -> relaxed tolerance vs the f32 reference
    assert jnp.allclose(out, ref, atol=2e-2, rtol=0), float(jnp.max(jnp.abs(out - ref)))

    print("KERNEL_OK")
</pallas_src>

<mosaic_0001>
module attributes {stable_mosaic.version = 11 : i64} {
  func.func @_adversary_kernel(%arg0: i32, %arg1: memref<128x32xbf16, #tpu.memory_space<vmem>>, %arg2: memref<128x32xbf16, #tpu.memory_space<vmem>>, %arg3: memref<32x128xbf16, #tpu.memory_space<vmem>>, %arg4: memref<1x128xf32, #tpu.memory_space<vmem>>, %arg5: memref<128x128xbf16, #tpu.memory_space<vmem>>, %arg6: memref<32x128xbf16, #tpu.memory_space<vmem>>, %arg7: memref<1x128xf32, #tpu.memory_space<vmem>>, %arg8: memref<1x128xf32, #tpu.memory_space<vmem>>, %arg9: memref<1x1xf32, #tpu.memory_space<vmem>>, %arg10: memref<1x128xf32, #tpu.memory_space<vmem>>) attributes {dimension_semantics = [#tpu.dimension_semantics<parallel>], iteration_bounds = array<i64: 1>, scalar_prefetch = 0 : i64, scratch_operands = 0 : i64, tpu.core_type = #tpu.core_type<tc>, window_params = [{transform_indices = @transform_0, window_bounds = array<i64: 128, 32>}, {transform_indices = @transform_1, window_bounds = array<i64: 128, 32>}, {pipeline_mode = #tpu.pipeline_mode<synchronous>, transform_indices = @transform_2, window_bounds = array<i64: 32, 128>}, {pipeline_mode = #tpu.pipeline_mode<synchronous>, transform_indices = @transform_3, window_bounds = array<i64: 1, 128>}, {pipeline_mode = #tpu.pipeline_mode<synchronous>, transform_indices = @transform_4, window_bounds = array<i64: 128, 128>}, {pipeline_mode = #tpu.pipeline_mode<synchronous>, transform_indices = @transform_5, window_bounds = array<i64: 32, 128>}, {pipeline_mode = #tpu.pipeline_mode<synchronous>, transform_indices = @transform_6, window_bounds = array<i64: 1, 128>}, {pipeline_mode = #tpu.pipeline_mode<synchronous>, transform_indices = @transform_7, window_bounds = array<i64: 1, 128>}, {pipeline_mode = #tpu.pipeline_mode<synchronous>, transform_indices = @transform_8, window_bounds = array<i64: 1, 1>}, {transform_indices = @transform_9, window_bounds = array<i64: 1, 128>}]} {
    %c0 = arith.constant 0 : index
    %c0_0 = arith.constant 0 : index
    %0 = vector.load %arg1[%c0, %c0_0] : memref<128x32xbf16, #tpu.memory_space<vmem>>, vector<128x32xbf16>
    %c0_1 = arith.constant 0 : index
    %c0_2 = arith.constant 0 : index
    %1 = vector.load %arg3[%c0_1, %c0_2] : memref<32x128xbf16, #tpu.memory_space<vmem>>, vector<32x128xbf16>
    %cst = arith.constant dense<0.000000e+00> : vector<128x128xf32>
    %2 = tpu.matmul %0, %1, %cst {dimension_numbers = #tpu.dot_dimension_numbers<[1], [0], [0], [1], [0, 0, 1, 1], [], []>} : vector<128x32xbf16>, vector<32x128xbf16>, vector<128x128xf32> -> vector<128x128xf32>
    %c0_3 = arith.constant 0 : index
    %c0_4 = arith.constant 0 : index
    %3 = vector.load %arg4[%c0_3, %c0_4] : memref<1x128xf32, #tpu.memory_space<vmem>>, vector<1x128xf32>
    %4 = vector.broadcast %3 : vector<1x128xf32> to vector<128x128xf32>
    %5 = arith.addf %2, %4 : vector<128x128xf32>
    %6 = arith.truncf %5 : vector<128x128xf32> to vector<128x128xbf16>
    %c0_5 = arith.constant 0 : index
    %c0_6 = arith.constant 0 : index
    %7 = vector.load %arg5[%c0_5, %c0_6] : memref<128x128xbf16, #tpu.memory_space<vmem>>, vector<128x128xbf16>
    %cst_7 = arith.constant dense<0.000000e+00> : vector<128x128xf32>
    %8 = tpu.matmul %6, %7, %cst_7 {dimension_numbers = #tpu.dot_dimension_numbers<[1], [0], [0], [1], [0, 0, 1, 1], [], []>} : vector<128x128xbf16>, vector<128x128xbf16>, vector<128x128xf32> -> vector<128x128xf32>
    %c0_8 = arith.constant 0 : index
    %c0_9 = arith.constant 0 : index
    %9 = vector.load %arg2[%c0_8, %c0_9] : memref<128x32xbf16, #tpu.memory_space<vmem>>, vector<128x32xbf16>
    %c0_10 = arith.constant 0 : index
    %c0_11 = arith.constant 0 : index
    %10 = vector.load %arg6[%c0_10, %c0_11] : memref<32x128xbf16, #tpu.memory_space<vmem>>, vector<32x128xbf16>
    %cst_12 = arith.constant dense<0.000000e+00> : vector<128x128xf32>
    %11 = tpu.matmul %9, %10, %cst_12 {dimension_numbers = #tpu.dot_dimension_numbers<[1], [0], [0], [1], [0, 0, 1, 1], [], []>} : vector<128x32xbf16>, vector<32x128xbf16>, vector<128x128xf32> -> vector<128x128xf32>
    %12 = arith.addf %8, %11 : vector<128x128xf32>
    %c0_13 = arith.constant 0 : index
    %c0_14 = arith.constant 0 : index
    %13 = vector.load %arg7[%c0_13, %c0_14] : memref<1x128xf32, #tpu.memory_space<vmem>>, vector<1x128xf32>
    %14 = vector.broadcast %13 : vector<1x128xf32> to vector<128x128xf32>
    %15 = arith.addf %12, %14 : vector<128x128xf32>
    %cst_15 = arith.constant 0.000000e+00 : f32
    %16 = vector.broadcast %cst_15 : f32 to vector<128x128xf32>
    %17 = arith.maximumf %15, %16 : vector<128x128xf32>
    %c0_16 = arith.constant 0 : index
    %c0_17 = arith.constant 0 : index
    %18 = vector.load %arg8[%c0_16, %c0_17] : memref<1x128xf32, #tpu.memory_space<vmem>>, vector<1x128xf32>
    %19 = tpu.transpose %17, [1, 0] : vector<128x128xf32> -> vector<128x128xf32>
    %cst_18 = arith.constant dense<0.000000e+00> : vector<1x128xf32>
    %20 = tpu.matmul %18, %19, %cst_18 {dimension_numbers = #tpu.dot_dimension_numbers<[1], [0], [0], [1], [0, 0, 1, 1], [], []>} : vector<1x128xf32>, vector<128x128xf32>, vector<1x128xf32> -> vector<1x128xf32>
    %c0_19 = arith.constant 0 : index
    %c0_20 = arith.constant 0 : index
    %21 = vector.load %arg9[%c0_19, %c0_20] : memref<1x1xf32, #tpu.memory_space<vmem>>, vector<1x1xf32>
    %22 = vector.broadcast %21 : vector<1x1xf32> to vector<1x128xf32>
    %23 = arith.addf %20, %22 : vector<1x128xf32>
    %24 = arith.negf %23 : vector<1x128xf32>
    %25 = math.exp %24 : vector<1x128xf32>
    %cst_21 = arith.constant 1.000000e+00 : f32
    %26 = vector.broadcast %cst_21 : f32 to vector<1x128xf32>
    %27 = arith.addf %26, %25 : vector<1x128xf32>
    %28 = arith.divf %26, %27 : vector<1x128xf32>
    %c0_22 = arith.constant 0 : index
    %c0_23 = arith.constant 0 : index
    %29 = vector.load %arg10[%c0_22, %c0_23] : memref<1x128xf32, #tpu.memory_space<vmem>>, vector<1x128xf32>
    tpu.vector_store %arg10[%c0_22, %c0_23], %28 {strides = array<i32>} : memref<1x128xf32, #tpu.memory_space<vmem>>, vector<1x128xf32>,
    return
  }
  func.func @transform_0(%arg0: i32) -> (i32, i32) {
    %c0_i32 = arith.constant 0 : i32
    %c0_i32_0 = arith.constant 0 : i32
    return %arg0, %c0_i32 : i32, i32
  }
  func.func @transform_1(%arg0: i32) -> (i32, i32) {
    %c0_i32 = arith.constant 0 : i32
    %c0_i32_0 = arith.constant 0 : i32
    return %arg0, %c0_i32 : i32, i32
  }
  func.func @transform_2(%arg0: i32) -> (i32, i32) {
    %c0_i32 = arith.constant 0 : i32
    %c0_i32_0 = arith.constant 0 : i32
    %c0_i32_1 = arith.constant 0 : i32
    return %c0_i32, %c0_i32_0 : i32, i32
  }
  func.func @transform_3(%arg0: i32) -> (i32, i32) {
    %c0_i32 = arith.constant 0 : i32
    %c0_i32_0 = arith.constant 0 : i32
    %c0_i32_1 = arith.constant 0 : i32
    return %c0_i32, %c0_i32_0 : i32, i32
  }
  func.func @transform_4(%arg0: i32) -> (i32, i32) {
    %c0_i32 = arith.constant 0 : i32
    %c0_i32_0 = arith.constant 0 : i32
    %c0_i32_1 = arith.constant 0 : i32
    return %c0_i32, %c0_i32_0 : i32, i32
  }
  func.func @transform_5(%arg0: i32) -> (i32, i32) {
    %c0_i32 = arith.constant 0 : i32
    %c0_i32_0 = arith.constant 0 : i32
    %c0_i32_1 = arith.constant 0 : i32
    return %c0_i32, %c0_i32_0 : i32, i32
  }
  func.func @transform_6(%arg0: i32) -> (i32, i32) {
    %c0_i32 = arith.constant 0 : i32
    %c0_i32_0 = arith.constant 0 : i32
    %c0_i32_1 = arith.constant 0 : i32
    return %c0_i32, %c0_i32_0 : i32, i32
  }
  func.func @transform_7(%arg0: i32) -> (i32, i32) {
    %c0_i32 = arith.constant 0 : i32
    %c0_i32_0 = arith.constant 0 : i32
    %c0_i32_1 = arith.constant 0 : i32
    return %c0_i32, %c0_i32_0 : i32, i32
  }
  func.func @transform_8(%arg0: i32) -> (i32, i32) {
    %c0_i32 = arith.constant 0 : i32
    %c0_i32_0 = arith.constant 0 : i32
    %c0_i32_1 = arith.constant 0 : i32
    return %c0_i32, %c0_i32_0 : i32, i32
  }
  func.func @transform_9(%arg0: i32) -> (i32, i32) {
    %c0_i32 = arith.constant 0 : i32
    %c0_i32_0 = arith.constant 0 : i32
    return %arg0, %c0_i32 : i32, i32
  }
}

</mosaic_0001>

<llo_original>
// kernel: tpu_custom_call.1
$region0: #{tpu_custom_call.1}
  #allocation0 [shape = 'u32[]', space=smem, size = 0x4, offset = 0x4, fixed_abs, tag = 'smem constant byte address 0x4 - core index']
  #allocation1 [shape = 'u32[144,128]{1,0:T(1,128)}', space=vmem, size = 0x12000, scoped, tag = 'internal scratch']
  #allocation2 [shape = 'f32[1,1]{1,0:T(1,128)S(1)}', space=vmem, size = 0x200, scoped, tag = 'scoped memory for tpu_custom_call.1']
  %s0 = inlined_call_operand.vmem [shape: bf16[128,32], index: 0, kind: input, shape index: {}]
  %s1 = inlined_call_operand.vmem [shape: bf16[128,32], index: 1, kind: input, shape index: {}]
  %s2 = inlined_call_operand.vmem [shape: bf16[32,128], index: 2, kind: input, shape index: {}]
  %s3 = inlined_call_operand.vmem [shape: f32[1,128], index: 3, kind: input, shape index: {}]
  %s4 = inlined_call_operand.vmem [shape: bf16[128,128], index: 4, kind: input, shape index: {}]
  %s5 = inlined_call_operand.vmem [shape: bf16[32,128], index: 5, kind: input, shape index: {}]
  %s6 = inlined_call_operand.vmem [shape: f32[1,128], index: 6, kind: input, shape index: {}]
  %s7 = inlined_call_operand.vmem [shape: f32[1,128], index: 7, kind: input, shape index: {}]
  %s8 = inlined_call_operand.<no memory space> [shape: f32[1,1], index: 8, kind: input, shape index: {}]
  %s9 = inlined_call_operand.hbm [shape: f32[1,128], index: 9, kind: output, shape index: {}]
  %s10 = sld [smem:[#allocation0]]
  $region46: #{tpu_custom_call.1} parent=0
    _
  %s12 = ssub.s32 1, %s10
  %s13 = scalar_select 0, %s12, %s10
  %v14 = vstv %s8
  %15 = vst [vmem:[#allocation2] sm:$0x1] %v14
  $region1: #{tpu_custom_call.1} parent=0
    #allocation3 [shape = 'u8[512]{0}', space=vmem, size = 0x400, scoped, tag = 'output window, operand 0, single buffered']
    #allocation4 [shape = 's32[1]{0}', space=sflag, size = 0x4, scoped, tag = 'scoped memory for tpu_custom_call.1']
    %16 = vsyncpa [#allocation4], 0
    // Predicated region
    $region2: #{tpu_custom_call.1} parent=1 // pred_check
      _
    $region3: #{tpu_custom_call.1} parent=1 // pred_check_branch
      %18 = sbr.rel (0) target = $region5
    $region4: #{tpu_custom_call.1} parent=1 // pred_region
      _
    $region5: #{tpu_custom_call.1} parent=1 // pred_fallthru
      _
    // Predicated region
    $region6: #{tpu_custom_call.1} parent=1 // pred_check
      _
    $region7: #{tpu_custom_call.1} parent=1 // pred_check_branch
      %20 = sbr.rel (0) target = $region9
    $region8: #{tpu_custom_call.1} parent=1 // pred_region
      _
    $region9: #{tpu_custom_call.1} parent=1 // pred_fallthru
      _
    // Predicated region
    $region10: #{tpu_custom_call.1} parent=1 // pred_check
      _
    $region11: #{tpu_custom_call.1} parent=1 // pred_check_branch
      %22 = sbr.rel (0) target = $region13
    $region12: #{tpu_custom_call.1} parent=1 // pred_region
      _
    $region13: #{tpu_custom_call.1} parent=1 // pred_fallthru
      _
    // Predicated region
    $region14: #{tpu_custom_call.1} parent=1 // pred_check
      _
    $region15: #{tpu_custom_call.1} parent=1 // pred_check_branch
      %24 = sbr.rel (0) target = $region17
    $region16: #{tpu_custom_call.1} parent=1 // pred_region
      _
    $region17: #{tpu_custom_call.1} parent=1 // pred_fallthru
      _
    // Predicated region
    $region18: #{tpu_custom_call.1} parent=1 // pred_check
      _
    $region19: #{tpu_custom_call.1} parent=1 // pred_check_branch
      %26 = sbr.rel (0) target = $region21
    $region20: #{tpu_custom_call.1} parent=1 // pred_region
      _
    $region21: #{tpu_custom_call.1} parent=1 // pred_fallthru
      _
    // Predicated region
    $region22: #{tpu_custom_call.1} parent=1 // pred_check
      _
    $region23: #{tpu_custom_call.1} parent=1 // pred_check_branch
      %28 = sbr.rel (0) target = $region25
    $region24: #{tpu_custom_call.1} parent=1 // pred_region
      _
    $region25: #{tpu_custom_call.1} parent=1 // pred_fallthru
      _
    // Predicated region
    $region26: #{tpu_custom_call.1} parent=1 // pred_check
      _
    $region27: #{tpu_custom_call.1} parent=1 // pred_check_branch
      %30 = sbr.rel (0) target = $region29
    $region28: #{tpu_custom_call.1} parent=1 // pred_region
      _
    $region29: #{tpu_custom_call.1} parent=1 // pred_fallthru
      _
    // Predicated region
    $region30: #{tpu_custom_call.1} parent=1 // pred_check
      _
    $region31: #{tpu_custom_call.1} parent=1 // pred_check_branch
      %32 = sbr.rel (0) target = $region33
    $region32: #{tpu_custom_call.1} parent=1 // pred_region
      _
    $region33: #{tpu_custom_call.1} parent=1 // pred_fallthru
      _
    // Predicated region
    $region34: #{tpu_custom_call.1} parent=1 // pred_check
      _
    $region35: #{tpu_custom_call.1} parent=1 // pred_check_branch
      %34 = sbr.rel (0) target = $region37
    $region36: #{tpu_custom_call.1} parent=1 // pred_region
      _
    $region37: #{tpu_custom_call.1} parent=1 // pred_fallthru
      _
    %v36 = vld [vmem:[%s0] sm:$0xf]
    %v37 = vld [vmem:[%s0 + $0x4] sm:$0xf]
    %v38 = vld [vmem:[%s0 + $0x8] sm:$0xf]
    %v39 = vld [vmem:[%s0 + $0xc] sm:$0xf]
    %v40 = vld [vmem:[%s0 + $0x10] sm:$0xf]
    %v41 = vld [vmem:[%s0 + $0x14] sm:$0xf]
    %v42 = vld [vmem:[%s0 + $0x18] sm:$0xf]
    %v43 = vld [vmem:[%s0 + $0x1c] sm:$0xf]
    %v44 = vld [vmem:[%s0 + $0x20] sm:$0xf]
    %v45 = vld [vmem:[%s0 + $0x24] sm:$0xf]
    %v46 = vld [vmem:[%s0 + $0x28] sm:$0xf]
    %v47 = vld [vmem:[%s0 + $0x2c] sm:$0xf]
    %v48 = vld [vmem:[%s0 + $0x30] sm:$0xf]
    %v49 = vld [vmem:[%s0 + $0x34] sm:$0xf]
    %v50 = vld [vmem:[%s0 + $0x38] sm:$0xf]
    %v51 = vld [vmem:[%s0 + $0x3c] sm:$0xf]
    %v52 = vld [vmem:[%s2] sm:$0xf]
    %v53 = vld [vmem:[%s2 + $0x4] sm:$0xf]
    %v54 = vld [vmem:[%s2 + $0x8] sm:$0xf]
    %v55 = vld [vmem:[%s2 + $0xc] sm:$0xf]
    %v56 = vld [vmem:[%s3] sm:$0x1]
    %v58 = vlaneseq
    %v59 = vshrl.u32 %v58, 7
    %v60 = vsub.s32 0, %v59
    %v61 = vrot.slane %v56, %v60
    %v79 = vunpack.c.l.b16 %v36
    %v80 = vunpack.c.l.b16 %v37
    %v81 = vunpack.c.l.b16 %v38
    %v82 = vunpack.c.l.b16 %v39
    %v83 = vunpack.c.l.b16 %v40
    %v84 = vunpack.c.l.b16 %v41
    %v85 = vunpack.c.l.b16 %v42
    %v86 = vunpack.c.l.b16 %v43
    %v87 = vunpack.c.l.b16 %v44
    %v88 = vunpack.c.l.b16 %v45
    %v89 = vunpack.c.l.b16 %v46
    %v90 = vunpack.c.l.b16 %v47
    %v91 = vunpack.c.l.b16 %v48
    %v92 = vunpack.c.l.b16 %v49
    %v93 = vunpack.c.l.b16 %v50
    %v94 = vunpack.c.l.b16 %v51
    %v95 = vpack.c.b16 %v80, %v79
    %v96 = vpack.c.b16 %v82, %v81
    %v97 = vpack.c.b16 %v84, %v83
    %v98 = vpack.c.b16 %v86, %v85
    %v99 = vpack.c.b16 %v88, %v87
    %v100 = vpack.c.b16 %v90, %v89
    %v101 = vpack.c.b16 %v92, %v91
    %v102 = vpack.c.b16 %v94, %v93
    %v107 = vunpack.c.l.b16 %v52
    %v108 = vunpack.c.l.b16 %v53
    %v109 = vunpack.c.l.b16 %v54
    %v110 = vunpack.c.l.b16 %v55
    %v111 = vpack.c.b16 %v108, %v107
    %v112 = vpack.c.b16 %v110, %v109
    %vm115 = vcmask 261120
    %v117 = vsel %vm115, %v95, 0
    %v120 = vsel %vm115, %v96, 0
    %v123 = vsel %vm115, %v97, 0
    %v126 = vsel %vm115, %v98, 0
    %v129 = vsel %vm115, %v99, 0
    %v132 = vsel %vm115, %v100, 0
    %v135 = vsel %vm115, %v101, 0
    %v138 = vsel %vm115, %v102, 0
    %140 = vmatprep.subr.bf16.mxu0 0
    %141 = vmatpush1.bf16.msra.mxu0 %v111
    %142 = vmatprep.subr.bf16.mxu0 0
    %143 = vmatpush1.bf16.msra.mxu0 %v112
    %144 = vmatprep.subr.bf16.mxu0 0
    %145 = vmatpush1.bf16.msra.mxu0 0
    %146 = vmatprep.subr.bf16.mxu0 0
    %147 = vmatpush1.bf16.msra.mxu0 0
    %148 = vmatprep.subr.bf16.mxu0 0
    %149 = vmatpush1.bf16.msra.mxu0 0
    %150 = vmatprep.subr.bf16.mxu0 0
    %151 = vmatpush1.bf16.msra.mxu0 0
    %152 = vmatprep.subr.bf16.mxu0 0
    %153 = vmatpush1.bf16.msra.mxu0 0
    %154 = vmatprep.subr.bf16.mxu0 0
    %155 = vmatpush1.bf16.msra.mxu0 0
    %156 = vmatprep.subr.bf16.mxu0 0
    %157 = vmatpush1.bf16.msra.mxu0 0
    %158 = vmatprep.subr.bf16.mxu0 0
    %159 = vmatpush1.bf16.msra.mxu0 0
    %160 = vmatprep.subr.bf16.mxu0 0
    %161 = vmatpush1.bf16.msra.mxu0 0
    %162 = vmatprep.subr.bf16.mxu0 0
    %163 = vmatpush1.bf16.msra.mxu0 0
    %164 = vmatprep.subr.bf16.mxu0 0
    %165 = vmatpush1.bf16.msra.mxu0 0
    %166 = vmatprep.subr.bf16.mxu0 0
    %167 = vmatpush1.bf16.msra.mxu0 0
    %168 = vmatprep.subr.bf16.mxu0 0
    %169 = vmatpush1.bf16.msra.mxu0 0
    %170 = vmatprep.subr.bf16.mxu0 0
    %171 = vmatpush1.bf16.msra.mxu0 0
    %172 = vmatprep.mubr.bf16.mxu0 0
    %173 = vmatmul.mubr.bf16.gmra.mrb[0].mxu0 %v117
    %v174 = vpop.f32.mrb[0].mxu0
    %v175 = vadd.f32 %v61, %v174
    %v176 = vpop.f32.mrb[0].mxu0
    %v177 = vpop.f32.mrb[0].mxu0
    %v178 = vadd.f32 %v61, %v177
    %v179 = vpop.f32.mrb[0].mxu0
    %180 = vmatprep.mubr.bf16.mxu0 0
    %181 = vmatmul.mubr.bf16.gmra.mrb[0].mxu0 %v120
    %v182 = vpop.f32.mrb[0].mxu0
    %v183 = vadd.f32 %v61, %v182
    %v184 = vpop.f32.mrb[0].mxu0
    %v185 = vpop.f32.mrb[0].mxu0
    %v186 = vadd.f32 %v61, %v185
    %v187 = vpop.f32.mrb[0].mxu0
    %188 = vmatprep.mubr.bf16.mxu0 0
    %189 = vmatmul.mubr.bf16.gmra.mrb[0].mxu0 %v123
    %v190 = vpop.f32.mrb[0].mxu0
    %v191 = vadd.f32 %v61, %v190
    %v192 = vpop.f32.mrb[0].mxu0
    %v193 = vpop.f32.mrb[0].mxu0
    %v194 = vadd.f32 %v61, %v193
    %v195 = vpop.f32.mrb[0].mxu0
    %196 = vmatprep.mubr.bf16.mxu0 0
    %197 = vmatmul.mubr.bf16.gmra.mrb[0].mxu0 %v126
    %v198 = vpop.f32.mrb[0].mxu0
    %v199 = vadd.f32 %v61, %v198
    %v200 = vpop.f32.mrb[0].mxu0
    %v201 = vpop.f32.mrb[0].mxu0
    %v202 = vadd.f32 %v61, %v201
    %v203 = vpop.f32.mrb[0].mxu0
    %204 = vmatprep.mubr.bf16.mxu0 0
    %205 = vmatmul.mubr.bf16.gmra.mrb[0].mxu0 %v129
    %v206 = vpop.f32.mrb[0].mxu0
    %v207 = vadd.f32 %v61, %v206
    %v208 = vpop.f32.mrb[0].mxu0
    %v209 = vpop.f32.mrb[0].mxu0
    %v210 = vadd.f32 %v61, %v209
    %v211 = vpop.f32.mrb[0].mxu0
    %212 = vmatprep.mubr.bf16.mxu0 0
    %213 = vmatmul.mubr.bf16.gmra.mrb[0].mxu0 %v132
    %v214 = vpop.f32.mrb[0].mxu0
    %v215 = vadd.f32 %v61, %v214
    %v216 = vpop.f32.mrb[0].mxu0
    %v217 = vpop.f32.mrb[0].mxu0
    %v218 = vadd.f32 %v61, %v217
    %v219 = vpop.f32.mrb[0].mxu0
    %220 = vmatprep.mubr.bf16.mxu0 0
    %221 = vmatmul.mubr.bf16.gmra.mrb[0].mxu0 %v135
    %v222 = vpop.f32.mrb[0].mxu0
    %v223 = vadd.f32 %v61, %v222
    %v224 = vpop.f32.mrb[0].mxu0
    %v225 = vpop.f32.mrb[0].mxu0
    %v226 = vadd.f32 %v61, %v225
    %v227 = vpop.f32.mrb[0].mxu0
    %228 = vmatprep.mubr.bf16.mxu0 0
    %229 = vmatmul.mubr.bf16.gmra.mrb[0].mxu0 %v138
    %v230 = vpop.f32.mrb[0].mxu0
    %v231 = vadd.f32 %v61, %v230
    %v232 = vpop.f32.mrb[0].mxu0
    %v233 = vpop.f32.mrb[0].mxu0
    %v234 = vadd.f32 %v61, %v233
    %v235 = vpop.f32.mrb[0].mxu0
    %236 = vdwg.mxu0
    %v237 = vpack.c.bf16 %v178, %v175
    %v238 = vpack.c.bf16 %v186, %v183
    %v239 = vpack.c.bf16 %v194, %v191
    %v240 = vpack.c.bf16 %v202, %v199
    %v241 = vpack.c.bf16 %v210, %v207
    %v242 = vpack.c.bf16 %v218, %v215
    %v243 = vpack.c.bf16 %v226, %v223
    %v244 = vpack.c.bf16 %v234, %v231
    %v245 = vld [vmem:[%s4] sm:$0xf]
    %v246 = vld [vmem:[%s4 + $0x4] sm:$0xf]
    %v247 = vld [vmem:[%s4 + $0x8] sm:$0xf]
    %v248 = vld [vmem:[%s4 + $0xc] sm:$0xf]
    %v249 = vld [vmem:[%s4 + $0x10] sm:$0xf]
    %v250 = vld [vmem:[%s4 + $0x14] sm:$0xf]
    %v251 = vld [vmem:[%s4 + $0x18] sm:$0xf]
    %v252 = vld [vmem:[%s4 + $0x1c] sm:$0xf]
    %v253 = vld [vmem:[%s4 + $0x20] sm:$0xf]
    %v254 = vld [vmem:[%s4 + $0x24] sm:$0xf]
    %v255 = vld [vmem:[%s4 + $0x28] sm:$0xf]
    %v256 = vld [vmem:[%s4 + $0x2c] sm:$0xf]
    %v257 = vld [vmem:[%s4 + $0x30] sm:$0xf]
    %v258 = vld [vmem:[%s4 + $0x34] sm:$0xf]
    %v259 = vld [vmem:[%s4 + $0x38] sm:$0xf]
    %v260 = vld [vmem:[%s4 + $0x3c] sm:$0xf]
    %v261 = vld [vmem:[%s1] sm:$0xf]
    %v262 = vld [vmem:[%s1 + $0x4] sm:$0xf]
    %v263 = vld [vmem:[%s1 + $0x8] sm:$0xf]
    %v264 = vld [vmem:[%s1 + $0xc] sm:$0xf]
    %v265 = vld [vmem:[%s1 + $0x10] sm:$0xf]
    %v266 = vld [vmem:[%s1 + $0x14] sm:$0xf]
    %v267 = vld [vmem:[%s1 + $0x18] sm:$0xf]
    %v268 = vld [vmem:[%s1 + $0x1c] sm:$0xf]
    %v269 = vld [vmem:[%s1 + $0x20] sm:$0xf]
    %v270 = vld [vmem:[%s1 + $0x24] sm:$0xf]
    %v271 = vld [vmem:[%s1 + $0x28] sm:$0xf]
    %v272 = vld [vmem:[%s1 + $0x2c] sm:$0xf]
    %v273 = vld [vmem:[%s1 + $0x30] sm:$0xf]
    %v274 = vld [vmem:[%s1 + $0x34] sm:$0xf]
    %v275 = vld [vmem:[%s1 + $0x38] sm:$0xf]
    %v276 = vld [vmem:[%s1 + $0x3c] sm:$0xf]
    %v277 = vld [vmem:[%s5] sm:$0xf]
    %v278 = vld [vmem:[%s5 + $0x4] sm:$0xf]
    %v279 = vld [vmem:[%s5 + $0x8] sm:$0xf]
    %v280 = vld [vmem:[%s5 + $0xc] sm:$0xf]
    %v297 = vunpack.c.l.b16 %v261
    %v298 = vunpack.c.l.b16 %v262
    %v299 = vunpack.c.l.b16 %v263
    %v300 = vunpack.c.l.b16 %v264
    %v301 = vunpack.c.l.b16 %v265
    %v302 = vunpack.c.l.b16 %v266
    %v303 = vunpack.c.l.b16 %v267
    %v304 = vunpack.c.l.b16 %v268
    %v305 = vunpack.c.l.b16 %v269
    %v306 = vunpack.c.l.b16 %v270
    %v307 = vunpack.c.l.b16 %v271
    %v308 = vunpack.c.l.b16 %v272
    %v309 = vunpack.c.l.b16 %v273
    %v310 = vunpack.c.l.b16 %v274
    %v311 = vunpack.c.l.b16 %v275
    %v312 = vunpack.c.l.b16 %v276
    %v313 = vpack.c.b16 %v298, %v297
    %v314 = vpack.c.b16 %v300, %v299
    %v315 = vpack.c.b16 %v302, %v301
    %v316 = vpack.c.b16 %v304, %v303
    %v317 = vpack.c.b16 %v306, %v305
    %v318 = vpack.c.b16 %v308, %v307
    %v319 = vpack.c.b16 %v310, %v309
    %v320 = vpack.c.b16 %v312, %v311
    %v325 = vunpack.c.l.b16 %v277
    %v326 = vunpack.c.l.b16 %v278
    %v327 = vunpack.c.l.b16 %v279
    %v328 = vunpack.c.l.b16 %v280
    %v329 = vpack.c.b16 %v326, %v325
    %v330 = vpack.c.b16 %v328, %v327
    %v334 = vsel %vm115, %v313, 0
    %v337 = vsel %vm115, %v314, 0
    %v340 = vsel %vm115, %v315, 0
    %v343 = vsel %vm115, %v316, 0
    %v346 = vsel %vm115, %v317, 0
    %v349 = vsel %vm115, %v318, 0
    %v352 = vsel %vm115, %v319, 0
    %v355 = vsel %vm115, %v320, 0
    %357 = vmatprep.subr.bf16.mxu0 0
    %358 = vmatpush1.bf16.msra.mxu0 %v329
    %359 = vmatprep.subr.bf16.mxu0 0
    %360 = vmatpush1.bf16.msra.mxu0 %v330
    %361 = vmatprep.subr.bf16.mxu0 0
    %362 = vmatpush1.bf16.msra.mxu0 0
    %363 = vmatprep.subr.bf16.mxu0 0
    %364 = vmatpush1.bf16.msra.mxu0 0
    %365 = vmatprep.subr.bf16.mxu0 0
    %366 = vmatpush1.bf16.msra.mxu0 0
    %367 = vmatprep.subr.bf16.mxu0 0
    %368 = vmatpush1.bf16.msra.mxu0 0
    %369 = vmatprep.subr.bf16.mxu0 0
    %370 = vmatpush1.bf16.msra.mxu0 0
    %371 = vmatprep.subr.bf16.mxu0 0
    %372 = vmatpush1.bf16.msra.mxu0 0
    %373 = vmatprep.subr.bf16.mxu0 0
    %374 = vmatpush1.bf16.msra.mxu0 0
    %375 = vmatprep.subr.bf16.mxu0 0
    %376 = vmatpush1.bf16.msra.mxu0 0
    %377 = vmatprep.subr.bf16.mxu0 0
    %378 = vmatpush1.bf16.msra.mxu0 0
    %379 = vmatprep.subr.bf16.mxu0 0
    %380 = vmatpush1.bf16.msra.mxu0 0
    %381 = vmatprep.subr.bf16.mxu0 0
    %382 = vmatpush1.bf16.msra.mxu0 0
    %383 = vmatprep.subr.bf16.mxu0 0
    %384 = vmatpush1.bf16.msra.mxu0 0
    %385 = vmatprep.subr.bf16.mxu0 0
    %386 = vmatpush1.bf16.msra.mxu0 0
    %387 = vmatprep.subr.bf16.mxu0 0
    %388 = vmatpush1.bf16.msra.mxu0 0
    %389 = vmatprep.mubr.bf16.mxu0 0
    %390 = vmatmul.mubr.bf16.gmra.mrb[0].mxu0 %v334
    %v391 = vpop.f32.mrb[0].mxu0
    %v392 = vadd.f32 0.0, %v391
    %v393 = vpop.f32.mrb[0].mxu0
    %v394 = vpop.f32.mrb[0].mxu0
    %v395 = vadd.f32 0.0, %v394
    %v396 = vpop.f32.mrb[0].mxu0
    %397 = vmatprep.mubr.bf16.mxu0 0
    %398 = vmatmul.mubr.bf16.gmra.mrb[0].mxu0 %v337
    %v399 = vpop.f32.mrb[0].mxu0
    %v400 = vadd.f32 0.0, %v399
    %v401 = vpop.f32.mrb[0].mxu0
    %v402 = vpop.f32.mrb[0].mxu0
    %v403 = vadd.f32 0.0, %v402
    %v404 = vpop.f32.mrb[0].mxu0
    %405 = vmatprep.mubr.bf16.mxu0 0
    %406 = vmatmul.mubr.bf16.gmra.mrb[0].mxu0 %v340
    %v407 = vpop.f32.mrb[0].mxu0
    %v408 = vadd.f32 0.0, %v407
    %v409 = vpop.f32.mrb[0].mxu0
    %v410 = vpop.f32.mrb[0].mxu0
    %v411 = vadd.f32 0.0, %v410
    %v412 = vpop.f32.mrb[0].mxu0
    %413 = vmatprep.mubr.bf16.mxu0 0
    %414 = vmatmul.mubr.bf16.gmra.mrb[0].mxu0 %v343
    %v415 = vpop.f32.mrb[0].mxu0
    %v416 = vadd.f32 0.0, %v415
    %v417 = vpop.f32.mrb[0].mxu0
    %v418 = vpop.f32.mrb[0].mxu0
    %v419 = vadd.f32 0.0, %v418
    %v420 = vpop.f32.mrb[0].mxu0
    %421 = vmatprep.mubr.bf16.mxu0 0
    %422 = vmatmul.mubr.bf16.gmra.mrb[0].mxu0 %v346
    %v423 = vpop.f32.mrb[0].mxu0
    %v424 = vadd.f32 0.0, %v423
    %v425 = vpop.f32.mrb[0].mxu0
    %v426 = vpop.f32.mrb[0].mxu0
    %v427 = vadd.f32 0.0, %v426
    %v428 = vpop.f32.mrb[0].mxu0
    %429 = vmatprep.mubr.bf16.mxu0 0
    %430 = vmatmul.mubr.bf16.gmra.mrb[0].mxu0 %v349
    %v431 = vpop.f32.mrb[0].mxu0
    %v432 = vadd.f32 0.0, %v431
    %v433 = vpop.f32.mrb[0].mxu0
    %v434 = vpop.f32.mrb[0].mxu0
    %v435 = vadd.f32 0.0, %v434
    %v436 = vpop.f32.mrb[0].mxu0
    %437 = vmatprep.mubr.bf16.mxu0 0
    %438 = vmatmul.mubr.bf16.gmra.mrb[0].mxu0 %v352
    %v439 = vpop.f32.mrb[0].mxu0
    %v440 = vadd.f32 0.0, %v439
    %v441 = vpop.f32.mrb[0].mxu0
    %v442 = vpop.f32.mrb[0].mxu0
    %v443 = vadd.f32 0.0, %v442
    %v444 = vpop.f32.mrb[0].mxu0
    %445 = vmatprep.mubr.bf16.mxu0 0
    %446 = vmatmul.mubr.bf16.gmra.mrb[0].mxu0 %v355
    %v447 = vpop.f32.mrb[0].mxu0
    %v448 = vadd.f32 0.0, %v447
    %v449 = vpop.f32.mrb[0].mxu0
    %v450 = vpop.f32.mrb[0].mxu0
    %v451 = vadd.f32 0.0, %v450
    %v452 = vpop.f32.mrb[0].mxu0
    %453 = vdwg.mxu0
    %v470 = vunpack.c.l.b16 %v245
    %v471 = vunpack.c.l.b16 %v246
    %v472 = vunpack.c.l.b16 %v247
    %v473 = vunpack.c.l.b16 %v248
    %v474 = vunpack.c.l.b16 %v249
    %v475 = vunpack.c.l.b16 %v250
    %v476 = vunpack.c.l.b16 %v251
    %v477 = vunpack.c.l.b16 %v252
    %v478 = vunpack.c.l.b16 %v253
    %v479 = vunpack.c.l.b16 %v254
    %v480 = vunpack.c.l.b16 %v255
    %v481 = vunpack.c.l.b16 %v256
    %v482 = vunpack.c.l.b16 %v257
    %v483 = vunpack.c.l.b16 %v258
    %v484 = vunpack.c.l.b16 %v259
    %v485 = vunpack.c.l.b16 %v260
    %v486 = vpack.c.b16 %v471, %v470
    %v487 = vpack.c.b16 %v473, %v472
    %v488 = vpack.c.b16 %v475, %v474
    %v489 = vpack.c.b16 %v477, %v476
    %v490 = vpack.c.b16 %v479, %v478
    %v491 = vpack.c.b16 %v481, %v480
    %v492 = vpack.c.b16 %v483, %v482
    %v493 = vpack.c.b16 %v485, %v484
    %502 = vmatprep.subr.bf16.mxu0 0
    %503 = vmatpush1.bf16.msra.mxu0 %v486
    %504 = vmatprep.subr.bf16.mxu0 0
    %505 = vmatpush1.bf16.msra.mxu0 %v487
    %506 = vmatprep.subr.bf16.mxu0 0
    %507 = vmatpush1.bf16.msra.mxu0 %v488
    %508 = vmatprep.subr.bf16.mxu0 0
    %509 = vmatpush1.bf16.msra.mxu0 %v489
    %510 = vmatprep.subr.bf16.mxu0 0
    %511 = vmatpush1.bf16.msra.mxu0 %v490
    %512 = vmatprep.subr.bf16.mxu0 0
    %513 = vmatpush1.bf16.msra.mxu0 %v491
    %514 = vmatprep.subr.bf16.mxu0 0
    %515 = vmatpush1.bf16.msra.mxu0 %v492
    %516 = vmatprep.subr.bf16.mxu0 0
    %517 = vmatpush1.bf16.msra.mxu0 %v493
    %518 = vmatprep.subr.bf16.mxu0 0
    %519 = vmatpush1.bf16.msra.mxu0 0
    %520 = vmatprep.subr.bf16.mxu0 0
    %521 = vmatpush1.bf16.msra.mxu0 0
    %522 = vmatprep.subr.bf16.mxu0 0
    %523 = vmatpush1.bf16.msra.mxu0 0
    %524 = vmatprep.subr.bf16.mxu0 0
    %525 = vmatpush1.bf16.msra.mxu0 0
    %526 = vmatprep.subr.bf16.mxu0 0
    %527 = vmatpush1.bf16.msra.mxu0 0
    %528 = vmatprep.subr.bf16.mxu0 0
    %529 = vmatpush1.bf16.msra.mxu0 0
    %530 = vmatprep.subr.bf16.mxu0 0
    %531 = vmatpush1.bf16.msra.mxu0 0
    %532 = vmatprep.subr.bf16.mxu0 0
    %533 = vmatpush1.bf16.msra.mxu0 0
    %534 = vmatprep.mubr.bf16.mxu0 0
    %535 = vmatmul.mubr.bf16.gmra.mrb[0].mxu0 %v237
    %v536 = vpop.f32.mrb[0].mxu0
    %v537 = vadd.f32 %v392, %v536
    %v538 = vpop.f32.mrb[0].mxu0
    %v539 = vpop.f32.mrb[0].mxu0
    %v540 = vadd.f32 %v395, %v539
    %v541 = vpop.f32.mrb[0].mxu0
    %542 = vmatprep.mubr.bf16.mxu0 0
    %543 = vmatmul.mubr.bf16.gmra.mrb[0].mxu0 %v238
    %v544 = vpop.f32.mrb[0].mxu0
    %v545 = vadd.f32 %v400, %v544
    %v546 = vpop.f32.mrb[0].mxu0
    %v547 = vpop.f32.mrb[0].mxu0
    %v548 = vadd.f32 %v403, %v547
    %v549 = vpop.f32.mrb[0].mxu0
    %550 = vmatprep.mubr.bf16.mxu0 0
    %551 = vmatmul.mubr.bf16.gmra.mrb[0].mxu0 %v239
    %v552 = vpop.f32.mrb[0].mxu0
    %v553 = vadd.f32 %v408, %v552
    %v554 = vpop.f32.mrb[0].mxu0
    %v555 = vpop.f32.mrb[0].mxu0
    %v556 = vadd.f32 %v411, %v555
    %v557 = vpop.f32.mrb[0].mxu0
    %558 = vmatprep.mubr.bf16.mxu0 0
    %559 = vmatmul.mubr.bf16.gmra.mrb[0].mxu0 %v240
    %v560 = vpop.f32.mrb[0].mxu0
    %v561 = vadd.f32 %v416, %v560
    %v562 = vpop.f32.mrb[0].mxu0
    %v563 = vpop.f32.mrb[0].mxu0
    %v564 = vadd.f32 %v419, %v563
    %v565 = vpop.f32.mrb[0].mxu0
    %566 = vmatprep.mubr.bf16.mxu0 0
    %567 = vmatmul.mubr.bf16.gmra.mrb[0].mxu0 %v241
    %v568 = vpop.f32.mrb[0].mxu0
    %v569 = vadd.f32 %v424, %v568
    %v570 = vpop.f32.mrb[0].mxu0
    %v571 = vpop.f32.mrb[0].mxu0
    %v572 = vadd.f32 %v427, %v571
    %v573 = vpop.f32.mrb[0].mxu0
    %574 = vmatprep.mubr.bf16.mxu0 0
    %575 = vmatmul.mubr.bf16.gmra.mrb[0].mxu0 %v242
    %v576 = vpop.f32.mrb[0].mxu0
    %v577 = vadd.f32 %v432, %v576
    %v578 = vpop.f32.mrb[0].mxu0
    %v579 = vpop.f32.mrb[0].mxu0
    %v580 = vadd.f32 %v435, %v579
    %v581 = vpop.f32.mrb[0].mxu0
    %582 = vmatprep.mubr.bf16.mxu0 0
    %583 = vmatmul.mubr.bf16.gmra.mrb[0].mxu0 %v243
    %v584 = vpop.f32.mrb[0].mxu0
    %v585 = vadd.f32 %v440, %v584
    %v586 = vpop.f32.mrb[0].mxu0
    %v587 = vpop.f32.mrb[0].mxu0
    %v588 = vadd.f32 %v443, %v587
    %v589 = vpop.f32.mrb[0].mxu0
    %590 = vmatprep.mubr.bf16.mxu0 0
    %591 = vmatmul.mubr.bf16.gmra.mrb[0].mxu0 %v244
    %v592 = vpop.f32.mrb[0].mxu0
    %v593 = vadd.f32 %v448, %v592
    %v594 = vpop.f32.mrb[0].mxu0
    %v595 = vpop.f32.mrb[0].mxu0
    %v596 = vadd.f32 %v451, %v595
    %v597 = vpop.f32.mrb[0].mxu0
    %598 = vdwg.mxu0
    %v599 = vld [vmem:[%s6] sm:$0x1]
    %v601 = vlaneseq
    %v602 = vshrl.u32 %v601, 7
    %v603 = vsub.s32 0, %v602
    %v604 = vrot.slane %v599, %v603
    %v606 = vadd.f32 %v537, %v604
    %v607 = vadd.f32 %v540, %v604
    %v608 = vadd.f32 %v545, %v604
    %v609 = vadd.f32 %v548, %v604
    %v610 = vadd.f32 %v553, %v604
    %v611 = vadd.f32 %v556, %v604
    %v612 = vadd.f32 %v561, %v604
    %v613 = vadd.f32 %v564, %v604
    %v614 = vadd.f32 %v569, %v604
    %v615 = vadd.f32 %v572, %v604
    %v616 = vadd.f32 %v577, %v604
    %v617 = vadd.f32 %v580, %v604
    %v618 = vadd.f32 %v585, %v604
    %v619 = vadd.f32 %v588, %v604
    %v620 = vadd.f32 %v593, %v604
    %v621 = vadd.f32 %v596, %v604
    %v622 = vmax.f32 %v606, 0.0
    %v623 = vmax.f32 %v607, 0.0
    %v624 = vmax.f32 %v608, 0.0
    %v625 = vmax.f32 %v609, 0.0
    %v626 = vmax.f32 %v610, 0.0
    %v627 = vmax.f32 %v611, 0.0
    %v628 = vmax.f32 %v612, 0.0
    %v629 = vmax.f32 %v613, 0.0
    %v630 = vmax.f32 %v614, 0.0
    %v631 = vmax.f32 %v615, 0.0
    %v632 = vmax.f32 %v616, 0.0
    %v633 = vmax.f32 %v617, 0.0
    %v634 = vmax.f32 %v618, 0.0
    %v635 = vmax.f32 %v619, 0.0
    %v636 = vmax.f32 %v620, 0.0
    %v637 = vmax.f32 %v621, 0.0
    %v638 = vld [vmem:[%s7] sm:$0x1]
    %v639 = vld [vmem:[#allocation2] sm:$0x1]
    %641 = vset.pattern.permute.xlu0 0
    %642 = vperm.xlu0 %641, %v639
    %v643 = vpop.permute.xlu0 %642
    %v645 = vlaneseq
    %v646 = vshrl.u32 %v645, 7
    %v647 = vsub.s32 0, %v646
    %v648 = vrot.slane %v643, %v647
    %649 = vmatprep.subr.mxu0 0.0
    %650 = vmatpush1.xpose.msra.mxu0 %v622
    %651 = vmatprep.subr.mxu0 0.0
    %652 = vmatpush1.xpose.msra.mxu0 %v623
    %653 = vmatprep.subr.mxu0 0.0
    %654 = vmatpush1.xpose.msra.mxu0 %v624
    %655 = vmatprep.subr.mxu0 0.0
    %656 = vmatpush1.xpose.msra.mxu0 %v625
    %657 = vmatprep.subr.mxu0 0.0
    %658 = vmatpush1.xpose.msra.mxu0 %v626
    %659 = vmatprep.subr.mxu0 0.0
    %660 = vmatpush1.xpose.msra.mxu0 %v627
    %661 = vmatprep.subr.mxu0 0.0
    %662 = vmatpush1.xpose.msra.mxu0 %v628
    %663 = vmatprep.subr.mxu0 0.0
    %664 = vmatpush1.xpose.msra.mxu0 %v629
    %665 = vmatprep.subr.mxu0 0.0
    %666 = vmatpush1.xpose.msra.mxu0 %v630
    %667 = vmatprep.subr.mxu0 0.0
    %668 = vmatpush1.xpose.msra.mxu0 %v631
    %669 = vmatprep.subr.mxu0 0.0
    %670 = vmatpush1.xpose.msra.mxu0 %v632
    %671 = vmatprep.subr.mxu0 0.0
    %672 = vmatpush1.xpose.msra.mxu0 %v633
    %673 = vmatprep.subr.mxu0 0.0
    %674 = vmatpush1.xpose.msra.mxu0 %v634
    %675 = vmatprep.subr.mxu0 0.0
    %676 = vmatpush1.xpose.msra.mxu0 %v635
    %677 = vmatprep.subr.mxu0 0.0
    %678 = vmatpush1.xpose.msra.mxu0 %v636
    %679 = vmatprep.subr.mxu0 0.0
    %680 = vmatpush1.xpose.msra.mxu0 %v637
    %681 = vmatprep.subr.mxu0 0.0
    %682 = vmatpush1.xpose.msra.mxu0 0.0
    %683 = vmatprep.subr.mxu0 0.0
    %684 = vmatpush1.xpose.msra.mxu0 0.0
    %685 = vmatprep.subr.mxu0 0.0
    %686 = vmatpush1.xpose.msra.mxu0 0.0
    %687 = vmatprep.subr.mxu0 0.0
    %688 = vmatpush1.xpose.msra.mxu0 0.0
    %689 = vmatprep.subr.mxu0 0.0
    %690 = vmatpush1.xpose.msra.mxu0 0.0
    %691 = vmatprep.subr.mxu0 0.0
    %692 = vmatpush1.xpose.msra.mxu0 0.0
    %693 = vmatprep.subr.mxu0 0.0
    %694 = vmatpush1.xpose.msra.mxu0 0.0
    %695 = vmatprep.subr.mxu0 0.0
    %696 = vmatpush1.xpose.msra.mxu0 0.0
    %697 = vmatprep.subr.mxu0 0.0
    %698 = vmatpush1.xpose.msra.mxu0 0.0
    %699 = vmatprep.subr.mxu0 0.0
    %700 = vmatpush1.xpose.msra.mxu0 0.0
    %701 = vmatprep.subr.mxu0 0.0
    %702 = vmatpush1.xpose.msra.mxu0 0.0
    %703 = vmatprep.subr.mxu0 0.0
    %704 = vmatpush1.xpose.msra.mxu0 0.0
    %705 = vmatprep.subr.mxu0 0.0
    %706 = vmatpush1.xpose.msra.mxu0 0.0
    %707 = vmatprep.subr.mxu0 0.0
    %708 = vmatpush1.xpose.msra.mxu0 0.0
    %709 = vmatprep.subr.mxu0 0.0
    %710 = vmatpush1.xpose.msra.mxu0 0.0
    %711 = vmatprep.subr.mxu0 0.0
    %712 = vmatpush1.xpose.msra.mxu0 0.0
    %713 = vmatprep.mubr.f32.mxu0 0.0
    %714 = vmatmul.mubr.f32.gmra.mrb[0].mxu0 %v638
    %v715 = vpop.f32.mrb[0].mxu0
    %v716 = vadd.f32 %v648, %v715
    %v717 = vpop.f32.mrb[0].mxu0
    %718 = vdwg.mxu0
    %v719 = vxor.u32 %v716, 2147483648
    %v720 = vmul.f32 %v719, 1.442695
    %v721 = vpow.pop %v720
    %v722 = vadd.f32 %v721, 1.0
    %v723 = vrcp.pop %v722
    %v724 = vmul.f32 1.0, %v723
    %725 = vst [vmem:[#allocation3] sm:$0x1] %v724
    // Predicated region
    $region38: #{tpu_custom_call.1} parent=1 // pred_check
      _
    $region39: #{tpu_custom_call.1} parent=1 // pred_check_branch
      %727 = sbr.rel (0) target = $region41
    $region40: #{tpu_custom_call.1} parent=1 // pred_region
      %s729 = ssub.s32 16, 16
      %730 = vsyncadd [#allocation4], %s729
      %s732 = sshll.u32 [#allocation3], 4
      %s733 = int_to_ptr.vmem [resolvable:$true] %s732
      %735 = dma.vmem_to_hbm [thread:$0]  %s733, 16, %s9, [#allocation4]
    $region41: #{tpu_custom_call.1} parent=1 // pred_fallthru
      _
    // Predicated region
    $region42: #{tpu_custom_call.1} parent=1 // pred_check
      _
    $region43: #{tpu_custom_call.1} parent=1 // pred_check_branch
      %737 = sbr.rel (0) target = $region45
    $region44: #{tpu_custom_call.1} parent=1 // pred_region
      %738 = dma.done [#allocation4], 16
    $region45: #{tpu_custom_call.1} parent=1 // pred_fallthru
      _
    %739 = vsyncpa [#allocation4], 1

</llo_original>
